<compile_context>
chip_gen: v7x
topology: tpu7x:2x2x1
jax: 0.10.0
libtpu: 0.0.40
codegen_flags: <defaults>
</compile_context>

<pallas_src>
import numpy as np
import jax
import jax.numpy as jnp
from jax.experimental import pallas as pl
from jax.experimental.pallas import tpu as pltpu


def _make_spectral_kernel(E, O, M):
    """Kernel over xr/xi tiles of shape (E, M, TBH) (B*H on lanes), resident
    weights wr/wi of shape (E, O, M), producing or/oi tiles of (O, M, TBH)."""

    def kernel(xr_ref, xi_ref, wr_ref, wi_ref, or_ref, oi_ref):
        xr = xr_ref[...]                    # (E, M, TBH) f32
        xi = xi_ref[...]
        wr = wr_ref[...]                    # (E, O, M) f32, grid-resident
        wi = wi_ref[...]

        # out[o, m, b] = sum_e x[e, m, b] * w[e, o, m]  (complex product).
        # E is tiny -> static unroll; everything is pure VPU mul-add with the
        # dense B*H tile on the lane axis.
        acc_r = None
        acc_i = None
        for e in range(E):                  # static unroll; E is small
            xre = xr[e][None, :, :]         # (1, M, TBH)
            xie = xi[e][None, :, :]
            wre = wr[e][:, :, None]         # (O, M, 1) -> lane-broadcast once per e
            wie = wi[e][:, :, None]
            t_r = xre * wre - xie * wie     # (O, M, TBH)
            t_i = xre * wie + xie * wre
            acc_r = t_r if acc_r is None else acc_r + t_r
            acc_i = t_i if acc_i is None else acc_i + t_i

        or_ref[...] = acc_r                 # unmasked, lane-dense stores
        oi_ref[...] = acc_i

    return kernel


def _choose_tiling(bh, lane=128, max_tile=512):
    """Pad B*H to a lane-dense size and pick the per-step lane tile.

    Small problems -> one big step (no wasted 0.35us steps on 1-TC v5e/v6e).
    Large problems -> even number of max_tile-wide steps so both v7x
    TensorCores get balanced work.
    """
    bhp = ((bh + lane - 1) // lane) * lane
    if bhp <= max_tile:
        return bhp, bhp                     # single grid step
    tile = max_tile
    chunk = 2 * tile                        # even step count (v7x megacore)
    bhp = ((bhp + chunk - 1) // chunk) * chunk
    return bhp, tile


def _spectral_mul_pallas(xr, xi, wr, wi, tbh):
    """xr/xi: (E, M, BHp) f32; wr/wi: (E, O, M) f32 -> (or, oi): (O, M, BHp)."""
    E, M, BHp = xr.shape
    O = wr.shape[1]
    grid = (BHp // tbh,)

    kernel = _make_spectral_kernel(E, O, M)

    grid_spec = pltpu.PrefetchScalarGridSpec(
        num_scalar_prefetch=0,
        grid=grid,
        in_specs=[
            # X real/imag: one lane tile of B*H per grid step.
            pl.BlockSpec((E, M, tbh), lambda i: (0, 0, i)),
            pl.BlockSpec((E, M, tbh), lambda i: (0, 0, i)),
            # Weights: constant block index -> DMA'd once, VMEM-resident.
            pl.BlockSpec((E, O, M), lambda i: (0, 0, 0)),
            pl.BlockSpec((E, O, M), lambda i: (0, 0, 0)),
        ],
        out_specs=[
            pl.BlockSpec((O, M, tbh), lambda i: (0, 0, i)),
            pl.BlockSpec((O, M, tbh), lambda i: (0, 0, i)),
        ],
    )

    flops = 8 * E * O * M * BHp             # 4 mul + 4 add per complex MAC
    bytes_accessed = 4 * (2 * E * M * BHp + 2 * E * O * M + 2 * O * M * BHp)

    return pl.pallas_call(
        kernel,
        out_shape=(
            jax.ShapeDtypeStruct((O, M, BHp), jnp.float32),
            jax.ShapeDtypeStruct((O, M, BHp), jnp.float32),
        ),
        grid_spec=grid_spec,
        compiler_params=pltpu.CompilerParams(
            dimension_semantics=("parallel",),
            # Per-step footprint is < 1 MiB; 32 MiB is safe on all generations
            # (well under v7x's 64 MiB per-TC physical VMEM).
            vmem_limit_bytes=32 * 1024 * 1024,
        ),
        cost_estimate=pl.CostEstimate(
            flops=flops, transcendentals=0, bytes_accessed=bytes_accessed),
    )(xr, xi, wr, wi)


def spectral_conv1d_forward(x, weights_real, weights_imag):
    """Forward of SpectralConv1d.

    x:            (B, H, E, N) float32   (E == in_channels, N == seq_len)
    weights_real: (E, O, modes) float32
    weights_imag: (E, O, modes) float32
    returns:      (B, H, O, N) float32
    """
    B, H, E, N = x.shape
    O = weights_real.shape[1]
    M = weights_real.shape[2]
    BH = B * H

    # FFT along the last axis (glue, outside the kernel).
    x_ft = jnp.fft.rfft(x, axis=-1)                      # (B, H, E, N//2+1)
    a = x_ft[..., :M]                                    # (B, H, E, M)

    # Lane-dense layout: B*H goes onto the (last) lane axis, padded to 128k.
    xr = jnp.real(a).astype(jnp.float32).reshape(BH, E, M)
    xi = jnp.imag(a).astype(jnp.float32).reshape(BH, E, M)
    xr_t = jnp.transpose(xr, (1, 2, 0))                  # (E, M, BH)
    xi_t = jnp.transpose(xi, (1, 2, 0))

    BHp, TBH = _choose_tiling(BH)
    pad = BHp - BH
    if pad:
        xr_t = jnp.pad(xr_t, ((0, 0), (0, 0), (0, pad)))
        xi_t = jnp.pad(xi_t, ((0, 0), (0, 0), (0, pad)))

    wr = weights_real.astype(jnp.float32)                # (E, O, M)
    wi = weights_imag.astype(jnp.float32)

    or_t, oi_t = _spectral_mul_pallas(xr_t, xi_t, wr, wi, TBH)   # (O, M, BHp)

    or_ = jnp.transpose(or_t[:, :, :BH], (2, 0, 1)).reshape(B, H, O, M)
    oi_ = jnp.transpose(oi_t[:, :, :BH], (2, 0, 1)).reshape(B, H, O, M)
    out_c = (or_ + 1j * oi_).astype(jnp.complex64)

    out_ft = jnp.zeros((B, H, O, N // 2 + 1), dtype=jnp.complex64)
    out_ft = out_ft.at[..., :M].set(out_c)

    y = jnp.fft.irfft(out_ft, n=N, axis=-1)              # (B, H, O, N)
    return y.astype(jnp.float32)


def _reference_forward(x, wr, wi):
    """Pure-JAX reference mirroring the PyTorch module (for sanity check)."""
    B, H, E, N = x.shape
    O = wr.shape[1]
    modes = wr.shape[2]
    x_ft = jnp.fft.rfft(x, axis=-1)
    a = x_ft[..., :modes]
    real = jnp.einsum('bjix,iox->bjox', jnp.real(a), wr) - \
           jnp.einsum('bjix,iox->bjox', jnp.imag(a), wi)
    imag = jnp.einsum('bjix,iox->bjox', jnp.real(a), wi) + \
           jnp.einsum('bjix,iox->bjox', jnp.imag(a), wr)
    out_ft = jnp.zeros((B, H, O, N // 2 + 1), dtype=jnp.complex64)
    out_ft = out_ft.at[..., :modes].set(real + 1j * imag)
    return jnp.fft.irfft(out_ft, n=N, axis=-1)


if __name__ == "__main__":
    # Module hyper-params (small, consistent with the forward):
    in_channels = 4      # E
    out_channels = 8     # O
    seq_len = 16         # N
    B, H = 2, 4
    modes = min(32, seq_len // 2)     # = 8
    scale = 1.0 / (in_channels * out_channels)

    key = jax.random.PRNGKey(0)
    kx, kwr, kwi = jax.random.split(key, 3)

    # Deterministic parameter init (== scale * torch.rand semantics: U[0,1) * scale).
    weights_real = scale * jax.random.uniform(
        kwr, (in_channels, out_channels, modes), dtype=jnp.float32)
    weights_imag = scale * jax.random.uniform(
        kwi, (in_channels, out_channels, modes), dtype=jnp.float32)

    x = jax.random.normal(kx, (B, H, in_channels, seq_len), dtype=jnp.float32)

    y = spectral_conv1d_forward(x, weights_real, weights_imag)
    y = jax.block_until_ready(y)

    y_ref = jax.block_until_ready(_reference_forward(x, weights_real, weights_imag))
    assert y.shape == (B, H, out_channels, seq_len)
    np.testing.assert_allclose(np.asarray(y), np.asarray(y_ref), atol=1e-4, rtol=1e-4)

    print("KERNEL_OK")
</pallas_src>

<mosaic_0001>
module attributes {stable_mosaic.version = 11 : i64} {
  func.func @kernel(%arg0: i32, %arg1: memref<4x8x128xf32, #tpu.memory_space<vmem>>, %arg2: memref<4x8x128xf32, #tpu.memory_space<vmem>>, %arg3: memref<4x8x8xf32, #tpu.memory_space<vmem>>, %arg4: memref<4x8x8xf32, #tpu.memory_space<vmem>>, %arg5: memref<8x8x128xf32, #tpu.memory_space<vmem>>, %arg6: memref<8x8x128xf32, #tpu.memory_space<vmem>>) attributes {dimension_semantics = [#tpu.dimension_semantics<parallel>], iteration_bounds = array<i64: 1>, scalar_prefetch = 0 : i64, scratch_operands = 0 : i64, tpu.core_type = #tpu.core_type<tc>, window_params = [{transform_indices = @transform_0, window_bounds = array<i64: 4, 8, 128>}, {transform_indices = @transform_1, window_bounds = array<i64: 4, 8, 128>}, {pipeline_mode = #tpu.pipeline_mode<synchronous>, transform_indices = @transform_2, window_bounds = array<i64: 4, 8, 8>}, {pipeline_mode = #tpu.pipeline_mode<synchronous>, transform_indices = @transform_3, window_bounds = array<i64: 4, 8, 8>}, {transform_indices = @transform_4, window_bounds = array<i64: 8, 8, 128>}, {transform_indices = @transform_5, window_bounds = array<i64: 8, 8, 128>}]} {
    %c0 = arith.constant 0 : index
    %c0_0 = arith.constant 0 : index
    %c0_1 = arith.constant 0 : index
    %0 = vector.load %arg1[%c0, %c0_0, %c0_1] : memref<4x8x128xf32, #tpu.memory_space<vmem>>, vector<4x8x128xf32>
    %c0_2 = arith.constant 0 : index
    %c0_3 = arith.constant 0 : index
    %c0_4 = arith.constant 0 : index
    %1 = vector.load %arg2[%c0_2, %c0_3, %c0_4] : memref<4x8x128xf32, #tpu.memory_space<vmem>>, vector<4x8x128xf32>
    %c0_5 = arith.constant 0 : index
    %c0_6 = arith.constant 0 : index
    %c0_7 = arith.constant 0 : index
    %2 = vector.load %arg3[%c0_5, %c0_6, %c0_7] : memref<4x8x8xf32, #tpu.memory_space<vmem>>, vector<4x8x8xf32>
    %c0_8 = arith.constant 0 : index
    %c0_9 = arith.constant 0 : index
    %c0_10 = arith.constant 0 : index
    %3 = vector.load %arg4[%c0_8, %c0_9, %c0_10] : memref<4x8x8xf32, #tpu.memory_space<vmem>>, vector<4x8x8xf32>
    %4 = vector.extract_strided_slice %0 {offsets = [0, 0, 0], sizes = [1, 8, 128], strides = [1, 1, 1]} : vector<4x8x128xf32> to vector<1x8x128xf32>
    %5 = vector.shape_cast %4 : vector<1x8x128xf32> to vector<8x128xf32>
    %6 = vector.shape_cast %5 : vector<8x128xf32> to vector<1x8x128xf32>
    %7 = vector.extract_strided_slice %1 {offsets = [0, 0, 0], sizes = [1, 8, 128], strides = [1, 1, 1]} : vector<4x8x128xf32> to vector<1x8x128xf32>
    %8 = vector.shape_cast %7 : vector<1x8x128xf32> to vector<8x128xf32>
    %9 = vector.shape_cast %8 : vector<8x128xf32> to vector<1x8x128xf32>
    %10 = vector.extract_strided_slice %2 {offsets = [0, 0, 0], sizes = [1, 8, 8], strides = [1, 1, 1]} : vector<4x8x8xf32> to vector<1x8x8xf32>
    %11 = vector.shape_cast %10 : vector<1x8x8xf32> to vector<8x8xf32>
    %12 = vector.shape_cast %11 : vector<8x8xf32> to vector<8x8x1xf32>
    %13 = vector.extract_strided_slice %3 {offsets = [0, 0, 0], sizes = [1, 8, 8], strides = [1, 1, 1]} : vector<4x8x8xf32> to vector<1x8x8xf32>
    %14 = vector.shape_cast %13 : vector<1x8x8xf32> to vector<8x8xf32>
    %15 = vector.shape_cast %14 : vector<8x8xf32> to vector<8x8x1xf32>
    %16 = vector.broadcast %6 : vector<1x8x128xf32> to vector<8x8x128xf32>
    %17 = vector.broadcast %12 : vector<8x8x1xf32> to vector<8x8x128xf32>
    %18 = arith.mulf %16, %17 : vector<8x8x128xf32>
    %19 = vector.broadcast %9 : vector<1x8x128xf32> to vector<8x8x128xf32>
    %20 = vector.broadcast %15 : vector<8x8x1xf32> to vector<8x8x128xf32>
    %21 = arith.mulf %19, %20 : vector<8x8x128xf32>
    %22 = arith.subf %18, %21 : vector<8x8x128xf32>
    %23 = vector.broadcast %6 : vector<1x8x128xf32> to vector<8x8x128xf32>
    %24 = vector.broadcast %15 : vector<8x8x1xf32> to vector<8x8x128xf32>
    %25 = arith.mulf %23, %24 : vector<8x8x128xf32>
    %26 = vector.broadcast %9 : vector<1x8x128xf32> to vector<8x8x128xf32>
    %27 = vector.broadcast %12 : vector<8x8x1xf32> to vector<8x8x128xf32>
    %28 = arith.mulf %26, %27 : vector<8x8x128xf32>
    %29 = arith.addf %25, %28 : vector<8x8x128xf32>
    %30 = vector.extract_strided_slice %0 {offsets = [1, 0, 0], sizes = [1, 8, 128], strides = [1, 1, 1]} : vector<4x8x128xf32> to vector<1x8x128xf32>
    %31 = vector.shape_cast %30 : vector<1x8x128xf32> to vector<8x128xf32>
    %32 = vector.shape_cast %31 : vector<8x128xf32> to vector<1x8x128xf32>
    %33 = vector.extract_strided_slice %1 {offsets = [1, 0, 0], sizes = [1, 8, 128], strides = [1, 1, 1]} : vector<4x8x128xf32> to vector<1x8x128xf32>
    %34 = vector.shape_cast %33 : vector<1x8x128xf32> to vector<8x128xf32>
    %35 = vector.shape_cast %34 : vector<8x128xf32> to vector<1x8x128xf32>
    %36 = vector.extract_strided_slice %2 {offsets = [1, 0, 0], sizes = [1, 8, 8], strides = [1, 1, 1]} : vector<4x8x8xf32> to vector<1x8x8xf32>
    %37 = vector.shape_cast %36 : vector<1x8x8xf32> to vector<8x8xf32>
    %38 = vector.shape_cast %37 : vector<8x8xf32> to vector<8x8x1xf32>
    %39 = vector.extract_strided_slice %3 {offsets = [1, 0, 0], sizes = [1, 8, 8], strides = [1, 1, 1]} : vector<4x8x8xf32> to vector<1x8x8xf32>
    %40 = vector.shape_cast %39 : vector<1x8x8xf32> to vector<8x8xf32>
    %41 = vector.shape_cast %40 : vector<8x8xf32> to vector<8x8x1xf32>
    %42 = vector.broadcast %32 : vector<1x8x128xf32> to vector<8x8x128xf32>
    %43 = vector.broadcast %38 : vector<8x8x1xf32> to vector<8x8x128xf32>
    %44 = arith.mulf %42, %43 : vector<8x8x128xf32>
    %45 = vector.broadcast %35 : vector<1x8x128xf32> to vector<8x8x128xf32>
    %46 = vector.broadcast %41 : vector<8x8x1xf32> to vector<8x8x128xf32>
    %47 = arith.mulf %45, %46 : vector<8x8x128xf32>
    %48 = arith.subf %44, %47 : vector<8x8x128xf32>
    %49 = vector.broadcast %32 : vector<1x8x128xf32> to vector<8x8x128xf32>
    %50 = vector.broadcast %41 : vector<8x8x1xf32> to vector<8x8x128xf32>
    %51 = arith.mulf %49, %50 : vector<8x8x128xf32>
    %52 = vector.broadcast %35 : vector<1x8x128xf32> to vector<8x8x128xf32>
    %53 = vector.broadcast %38 : vector<8x8x1xf32> to vector<8x8x128xf32>
    %54 = arith.mulf %52, %53 : vector<8x8x128xf32>
    %55 = arith.addf %51, %54 : vector<8x8x128xf32>
    %56 = arith.addf %22, %48 : vector<8x8x128xf32>
    %57 = arith.addf %29, %55 : vector<8x8x128xf32>
    %58 = vector.extract_strided_slice %0 {offsets = [2, 0, 0], sizes = [1, 8, 128], strides = [1, 1, 1]} : vector<4x8x128xf32> to vector<1x8x128xf32>
    %59 = vector.shape_cast %58 : vector<1x8x128xf32> to vector<8x128xf32>
    %60 = vector.shape_cast %59 : vector<8x128xf32> to vector<1x8x128xf32>
    %61 = vector.extract_strided_slice %1 {offsets = [2, 0, 0], sizes = [1, 8, 128], strides = [1, 1, 1]} : vector<4x8x128xf32> to vector<1x8x128xf32>
    %62 = vector.shape_cast %61 : vector<1x8x128xf32> to vector<8x128xf32>
    %63 = vector.shape_cast %62 : vector<8x128xf32> to vector<1x8x128xf32>
    %64 = vector.extract_strided_slice %2 {offsets = [2, 0, 0], sizes = [1, 8, 8], strides = [1, 1, 1]} : vector<4x8x8xf32> to vector<1x8x8xf32>
    %65 = vector.shape_cast %64 : vector<1x8x8xf32> to vector<8x8xf32>
    %66 = vector.shape_cast %65 : vector<8x8xf32> to vector<8x8x1xf32>
    %67 = vector.extract_strided_slice %3 {offsets = [2, 0, 0], sizes = [1, 8, 8], strides = [1, 1, 1]} : vector<4x8x8xf32> to vector<1x8x8xf32>
    %68 = vector.shape_cast %67 : vector<1x8x8xf32> to vector<8x8xf32>
    %69 = vector.shape_cast %68 : vector<8x8xf32> to vector<8x8x1xf32>
    %70 = vector.broadcast %60 : vector<1x8x128xf32> to vector<8x8x128xf32>
    %71 = vector.broadcast %66 : vector<8x8x1xf32> to vector<8x8x128xf32>
    %72 = arith.mulf %70, %71 : vector<8x8x128xf32>
    %73 = vector.broadcast %63 : vector<1x8x128xf32> to vector<8x8x128xf32>
    %74 = vector.broadcast %69 : vector<8x8x1xf32> to vector<8x8x128xf32>
    %75 = arith.mulf %73, %74 : vector<8x8x128xf32>
    %76 = arith.subf %72, %75 : vector<8x8x128xf32>
    %77 = vector.broadcast %60 : vector<1x8x128xf32> to vector<8x8x128xf32>
    %78 = vector.broadcast %69 : vector<8x8x1xf32> to vector<8x8x128xf32>
    %79 = arith.mulf %77, %78 : vector<8x8x128xf32>
    %80 = vector.broadcast %63 : vector<1x8x128xf32> to vector<8x8x128xf32>
    %81 = vector.broadcast %66 : vector<8x8x1xf32> to vector<8x8x128xf32>
    %82 = arith.mulf %80, %81 : vector<8x8x128xf32>
    %83 = arith.addf %79, %82 : vector<8x8x128xf32>
    %84 = arith.addf %56, %76 : vector<8x8x128xf32>
    %85 = arith.addf %57, %83 : vector<8x8x128xf32>
    %86 = vector.extract_strided_slice %0 {offsets = [3, 0, 0], sizes = [1, 8, 128], strides = [1, 1, 1]} : vector<4x8x128xf32> to vector<1x8x128xf32>
    %87 = vector.shape_cast %86 : vector<1x8x128xf32> to vector<8x128xf32>
    %88 = vector.shape_cast %87 : vector<8x128xf32> to vector<1x8x128xf32>
    %89 = vector.extract_strided_slice %1 {offsets = [3, 0, 0], sizes = [1, 8, 128], strides = [1, 1, 1]} : vector<4x8x128xf32> to vector<1x8x128xf32>
    %90 = vector.shape_cast %89 : vector<1x8x128xf32> to vector<8x128xf32>
    %91 = vector.shape_cast %90 : vector<8x128xf32> to vector<1x8x128xf32>
    %92 = vector.extract_strided_slice %2 {offsets = [3, 0, 0], sizes = [1, 8, 8], strides = [1, 1, 1]} : vector<4x8x8xf32> to vector<1x8x8xf32>
    %93 = vector.shape_cast %92 : vector<1x8x8xf32> to vector<8x8xf32>
    %94 = vector.shape_cast %93 : vector<8x8xf32> to vector<8x8x1xf32>
    %95 = vector.extract_strided_slice %3 {offsets = [3, 0, 0], sizes = [1, 8, 8], strides = [1, 1, 1]} : vector<4x8x8xf32> to vector<1x8x8xf32>
    %96 = vector.shape_cast %95 : vector<1x8x8xf32> to vector<8x8xf32>
    %97 = vector.shape_cast %96 : vector<8x8xf32> to vector<8x8x1xf32>
    %98 = vector.broadcast %88 : vector<1x8x128xf32> to vector<8x8x128xf32>
    %99 = vector.broadcast %94 : vector<8x8x1xf32> to vector<8x8x128xf32>
    %100 = arith.mulf %98, %99 : vector<8x8x128xf32>
    %101 = vector.broadcast %91 : vector<1x8x128xf32> to vector<8x8x128xf32>
    %102 = vector.broadcast %97 : vector<8x8x1xf32> to vector<8x8x128xf32>
    %103 = arith.mulf %101, %102 : vector<8x8x128xf32>
    %104 = arith.subf %100, %103 : vector<8x8x128xf32>
    %105 = vector.broadcast %88 : vector<1x8x128xf32> to vector<8x8x128xf32>
    %106 = vector.broadcast %97 : vector<8x8x1xf32> to vector<8x8x128xf32>
    %107 = arith.mulf %105, %106 : vector<8x8x128xf32>
    %108 = vector.broadcast %91 : vector<1x8x128xf32> to vector<8x8x128xf32>
    %109 = vector.broadcast %94 : vector<8x8x1xf32> to vector<8x8x128xf32>
    %110 = arith.mulf %108, %109 : vector<8x8x128xf32>
    %111 = arith.addf %107, %110 : vector<8x8x128xf32>
    %112 = arith.addf %84, %104 : vector<8x8x128xf32>
    %113 = arith.addf %85, %111 : vector<8x8x128xf32>
    %c0_11 = arith.constant 0 : index
    %c0_12 = arith.constant 0 : index
    %c0_13 = arith.constant 0 : index
    %114 = vector.load %arg5[%c0_11, %c0_12, %c0_13] : memref<8x8x128xf32, #tpu.memory_space<vmem>>, vector<8x8x128xf32>
    tpu.vector_store %arg5[%c0_11, %c0_12, %c0_13], %112 {strides = array<i32>} : memref<8x8x128xf32, #tpu.memory_space<vmem>>, vector<8x8x128xf32>,
    %c0_14 = arith.constant 0 : index
    %c0_15 = arith.constant 0 : index
    %c0_16 = arith.constant 0 : index
    %115 = vector.load %arg6[%c0_14, %c0_15, %c0_16] : memref<8x8x128xf32, #tpu.memory_space<vmem>>, vector<8x8x128xf32>
    tpu.vector_store %arg6[%c0_14, %c0_15, %c0_16], %113 {strides = array<i32>} : memref<8x8x128xf32, #tpu.memory_space<vmem>>, vector<8x8x128xf32>,
    return
  }
  func.func @transform_0(%arg0: i32) -> (i32, i32, i32) {
    %c0_i32 = arith.constant 0 : i32
    %c0_i32_0 = arith.constant 0 : i32
    %c0_i32_1 = arith.constant 0 : i32
    return %c0_i32, %c0_i32_0, %arg0 : i32, i32, i32
  }
  func.func @transform_1(%arg0: i32) -> (i32, i32, i32) {
    %c0_i32 = arith.constant 0 : i32
    %c0_i32_0 = arith.constant 0 : i32
    %c0_i32_1 = arith.constant 0 : i32
    return %c0_i32, %c0_i32_0, %arg0 : i32, i32, i32
  }
  func.func @transform_2(%arg0: i32) -> (i32, i32, i32) {
    %c0_i32 = arith.constant 0 : i32
    %c0_i32_0 = arith.constant 0 : i32
    %c0_i32_1 = arith.constant 0 : i32
    %c0_i32_2 = arith.constant 0 : i32
    return %c0_i32, %c0_i32_0, %c0_i32_1 : i32, i32, i32
  }
  func.func @transform_3(%arg0: i32) -> (i32, i32, i32) {
    %c0_i32 = arith.constant 0 : i32
    %c0_i32_0 = arith.constant 0 : i32
    %c0_i32_1 = arith.constant 0 : i32
    %c0_i32_2 = arith.constant 0 : i32
    return %c0_i32, %c0_i32_0, %c0_i32_1 : i32, i32, i32
  }
  func.func @transform_4(%arg0: i32) -> (i32, i32, i32) {
    %c0_i32 = arith.constant 0 : i32
    %c0_i32_0 = arith.constant 0 : i32
    %c0_i32_1 = arith.constant 0 : i32
    return %c0_i32, %c0_i32_0, %arg0 : i32, i32, i32
  }
  func.func @transform_5(%arg0: i32) -> (i32, i32, i32) {
    %c0_i32 = arith.constant 0 : i32
    %c0_i32_0 = arith.constant 0 : i32
    %c0_i32_1 = arith.constant 0 : i32
    return %c0_i32, %c0_i32_0, %arg0 : i32, i32, i32
  }
}

</mosaic_0001>

<llo_original>
// kernel: tpu_custom_call.1
$region0: #{tpu_custom_call.1}
  #allocation0 [shape = 'u32[]', space=smem, size = 0x4, offset = 0x4, fixed_abs, tag = 'smem constant byte address 0x4 - core index']
  #allocation1 [shape = 'u32[144,128]{1,0:T(1,128)}', space=vmem, size = 0x12000, scoped, tag = 'internal scratch']
  %s0 = inlined_call_operand.hbm [shape: f32[4,8,128], index: 0, kind: input, shape index: {}]
  %s1 = inlined_call_operand.hbm [shape: f32[4,8,128], index: 1, kind: input, shape index: {}]
  %s2 = inlined_call_operand.hbm [shape: f32[4,8,8], index: 2, kind: input, shape index: {}]
  %s3 = inlined_call_operand.hbm [shape: f32[4,8,8], index: 3, kind: input, shape index: {}]
  %s4 = inlined_call_operand.hbm [shape: f32[8,8,128], index: 4, kind: output, shape index: {0}]
  %s5 = inlined_call_operand.hbm [shape: f32[8,8,128], index: 5, kind: output, shape index: {1}]
  %6 = xla_tuple %s4, %s5
  %s7 = sld [smem:[#allocation0]]
  $region50: #{tpu_custom_call.1} parent=0
    _
  %s9 = ssub.s32 1, %s7
  %s10 = scalar_select 0, %s9, %s7
  $region1: #{tpu_custom_call.1} parent=0
    #allocation2 [shape = 'u8[16384]{0}', space=vmem, size = 0x4000, scoped, tag = 'input window, operand 0, single buffered']
    #allocation3 [shape = 's32[1]{0}', space=sflag, size = 0x4, scoped, tag = 'scoped memory for tpu_custom_call.1']
    #allocation4 [shape = 's32[1]{0}', space=sflag, size = 0x4, scoped, tag = 'scoped memory for tpu_custom_call.1']
    #allocation5 [shape = 'u8[16384]{0}', space=vmem, size = 0x4000, scoped, tag = 'input window, operand 1, single buffered']
    #allocation6 [shape = 's32[1]{0}', space=sflag, size = 0x4, scoped, tag = 'scoped memory for tpu_custom_call.1']
    #allocation7 [shape = 'u8[16384]{0}', space=vmem, size = 0x4000, scoped, tag = 'input window, operand 2, single buffered']
    #allocation8 [shape = 'u8[16384]{0}', space=vmem, size = 0x4000, scoped, tag = 'input window, operand 3, single buffered']
    #allocation9 [shape = 's32[1]{0}', space=sflag, size = 0x4, scoped, tag = 'scoped memory for tpu_custom_call.1']
    #allocation10 [shape = 'u8[32768]{0}', space=vmem, size = 0x8000, scoped, tag = 'output window, operand 0, single buffered']
    #allocation11 [shape = 'u8[32768]{0}', space=vmem, size = 0x8000, scoped, tag = 'output window, operand 1, single buffered']
    #allocation12 [shape = 's32[1]{0}', space=sflag, size = 0x4, scoped, tag = 'scoped memory for tpu_custom_call.1']
    %11 = vsyncpa [#allocation3], 0
    %12 = vsyncpa [#allocation6], 0
    %13 = vsyncpa [#allocation9], 0
    %14 = vsyncpa [#allocation4], 0
    %15 = vsyncpa [#allocation12], 0
    // Predicated region
    $region2: #{tpu_custom_call.1} parent=1 // pred_check
      _
    $region3: #{tpu_custom_call.1} parent=1 // pred_check_branch
      %17 = sbr.rel (0) target = $region5
    $region4: #{tpu_custom_call.1} parent=1 // pred_region
      %s19 = ssub.s32 512, 512
      %20 = vsyncadd [#allocation3], %s19
      %s21 = sshll.u32 [#allocation2], 4
      %s22 = int_to_ptr.vmem [resolvable:$true] %s21
      %27 = dma.hbm_to_vmem [thread:$0]  %s0, 512, %s22, [#allocation3], 128, 128, 8
    $region5: #{tpu_custom_call.1} parent=1 // pred_fallthru
      _
    // Predicated region
    $region6: #{tpu_custom_call.1} parent=1 // pred_check
      _
    $region7: #{tpu_custom_call.1} parent=1 // pred_check_branch
      %29 = sbr.rel (0) target = $region9
    $region8: #{tpu_custom_call.1} parent=1 // pred_region
      %s31 = ssub.s32 512, 512
      %32 = vsyncadd [#allocation6], %s31
      %s33 = sshll.u32 [#allocation5], 4
      %s34 = int_to_ptr.vmem [resolvable:$true] %s33
      %39 = dma.hbm_to_vmem [thread:$0]  %s1, 512, %s34, [#allocation6], 128, 128, 8
    $region9: #{tpu_custom_call.1} parent=1 // pred_fallthru
      _
    // Predicated region
    $region10: #{tpu_custom_call.1} parent=1 // pred_check
      _
    $region11: #{tpu_custom_call.1} parent=1 // pred_check_branch
      %41 = sbr.rel (0) target = $region13
    $region12: #{tpu_custom_call.1} parent=1 // pred_region
      %s43 = ssub.s32 512, 512
      %44 = vsyncadd [#allocation6], %s43
      %s45 = sshll.u32 [#allocation7], 4
      %s46 = int_to_ptr.vmem [resolvable:$true] %s45
      %51 = dma.hbm_to_vmem [thread:$0]  %s2, 512, %s46, [#allocation6], 128, 128, 8
    $region13: #{tpu_custom_call.1} parent=1 // pred_fallthru
      _
    // Predicated region
    $region14: #{tpu_custom_call.1} parent=1 // pred_check
      _
    $region15: #{tpu_custom_call.1} parent=1 // pred_check_branch
      %53 = sbr.rel (0) target = $region17
    $region16: #{tpu_custom_call.1} parent=1 // pred_region
      %s55 = ssub.s32 512, 512
      %56 = vsyncadd [#allocation9], %s55
      %s57 = sshll.u32 [#allocation8], 4
      %s58 = int_to_ptr.vmem [resolvable:$true] %s57
      %63 = dma.hbm_to_vmem [thread:$0]  %s3, 512, %s58, [#allocation9], 128, 128, 8
    $region17: #{tpu_custom_call.1} parent=1 // pred_fallthru
      _
    // Predicated region
    $region18: #{tpu_custom_call.1} parent=1 // pred_check
      _
    $region19: #{tpu_custom_call.1} parent=1 // pred_check_branch
      %65 = sbr.rel (0) target = $region21
    $region20: #{tpu_custom_call.1} parent=1 // pred_region
      %66 = dma.done [#allocation3], 512
    $region21: #{tpu_custom_call.1} parent=1 // pred_fallthru
      _
    // Predicated region
    $region22: #{tpu_custom_call.1} parent=1 // pred_check
      _
    $region23: #{tpu_custom_call.1} parent=1 // pred_check_branch
      %68 = sbr.rel (0) target = $region25
    $region24: #{tpu_custom_call.1} parent=1 // pred_region
      %69 = dma.done [#allocation6], 512
    $region25: #{tpu_custom_call.1} parent=1 // pred_fallthru
      _
    // Predicated region
    $region26: #{tpu_custom_call.1} parent=1 // pred_check
      _
    $region27: #{tpu_custom_call.1} parent=1 // pred_check_branch
      %71 = sbr.rel (0) target = $region29
    $region28: #{tpu_custom_call.1} parent=1 // pred_region
      %72 = dma.done [#allocation6], 512
    $region29: #{tpu_custom_call.1} parent=1 // pred_fallthru
      _
    // Predicated region
    $region30: #{tpu_custom_call.1} parent=1 // pred_check
      _
    $region31: #{tpu_custom_call.1} parent=1 // pred_check_branch
      %74 = sbr.rel (0) target = $region33
    $region32: #{tpu_custom_call.1} parent=1 // pred_region
      %75 = dma.done [#allocation9], 512
    $region33: #{tpu_custom_call.1} parent=1 // pred_fallthru
      _
    %v76 = vld [vmem:[#allocation2] sm:$0xff]
    %v77 = vld [vmem:[#allocation2 + $0x8] sm:$0xff]
    %v78 = vld [vmem:[#allocation2 + $0x10] sm:$0xff]
    %v79 = vld [vmem:[#allocation2 + $0x18] sm:$0xff]
    %v80 = vld [vmem:[#allocation5] sm:$0xff]
    %v81 = vld [vmem:[#allocation5 + $0x8] sm:$0xff]
    %v82 = vld [vmem:[#allocation5 + $0x10] sm:$0xff]
    %v83 = vld [vmem:[#allocation5 + $0x18] sm:$0xff]
    %v84 = vld [vmem:[#allocation7] sm:$0xff]
    %v85 = vld [vmem:[#allocation7 + $0x8] sm:$0xff]
    %v86 = vld [vmem:[#allocation7 + $0x10] sm:$0xff]
    %v87 = vld [vmem:[#allocation7 + $0x18] sm:$0xff]
    %v88 = vld [vmem:[#allocation8] sm:$0xff]
    %v89 = vld [vmem:[#allocation8 + $0x8] sm:$0xff]
    %v90 = vld [vmem:[#allocation8 + $0x10] sm:$0xff]
    %v91 = vld [vmem:[#allocation8 + $0x18] sm:$0xff]
    %v92 = vlaneseq
    %v93 = vshrl.u32 %v92, 7
    %v94 = vsub.s32 0, %v93
    %v95 = vrot.slane %v84, %v94
    %97 = vbcast.lane.b32.xlu0 %v95, 256
    %v98 = vpop.permute.xlu0 %97
    %v99 = vlaneseq
    %v100 = vshrl.u32 %v99, 7
    %v101 = vsub.s32 1, %v100
    %v102 = vrot.slane %v84, %v101
    %104 = vbcast.lane.b32.xlu0 %v102, 256
    %v105 = vpop.permute.xlu0 %104
    %v106 = vlaneseq
    %v107 = vshrl.u32 %v106, 7
    %v108 = vsub.s32 2, %v107
    %v109 = vrot.slane %v84, %v108
    %111 = vbcast.lane.b32.xlu0 %v109, 256
    %v112 = vpop.permute.xlu0 %111
    %v113 = vlaneseq
    %v114 = vshrl.u32 %v113, 7
    %v115 = vsub.s32 3, %v114
    %v116 = vrot.slane %v84, %v115
    %118 = vbcast.lane.b32.xlu0 %v116, 256
    %v119 = vpop.permute.xlu0 %118
    %v120 = vlaneseq
    %v121 = vshrl.u32 %v120, 7
    %v122 = vsub.s32 4, %v121
    %v123 = vrot.slane %v84, %v122
    %125 = vbcast.lane.b32.xlu0 %v123, 256
    %v126 = vpop.permute.xlu0 %125
    %v127 = vlaneseq
    %v128 = vshrl.u32 %v127, 7
    %v129 = vsub.s32 5, %v128
    %v130 = vrot.slane %v84, %v129
    %132 = vbcast.lane.b32.xlu0 %v130, 256
    %v133 = vpop.permute.xlu0 %132
    %v134 = vlaneseq
    %v135 = vshrl.u32 %v134, 7
    %v136 = vsub.s32 6, %v135
    %v137 = vrot.slane %v84, %v136
    %139 = vbcast.lane.b32.xlu0 %v137, 256
    %v140 = vpop.permute.xlu0 %139
    %v141 = vlaneseq
    %v142 = vshrl.u32 %v141, 7
    %v143 = vsub.s32 7, %v142
    %v144 = vrot.slane %v84, %v143
    %146 = vbcast.lane.b32.xlu0 %v144, 256
    %v147 = vpop.permute.xlu0 %146
    %v148 = vlaneseq
    %v149 = vshrl.u32 %v148, 7
    %v150 = vsub.s32 0, %v149
    %v151 = vrot.slane %v88, %v150
    %153 = vbcast.lane.b32.xlu0 %v151, 256
    %v154 = vpop.permute.xlu0 %153
    %v155 = vlaneseq
    %v156 = vshrl.u32 %v155, 7
    %v157 = vsub.s32 1, %v156
    %v158 = vrot.slane %v88, %v157
    %160 = vbcast.lane.b32.xlu0 %v158, 256
    %v161 = vpop.permute.xlu0 %160
    %v162 = vlaneseq
    %v163 = vshrl.u32 %v162, 7
    %v164 = vsub.s32 2, %v163
    %v165 = vrot.slane %v88, %v164
    %167 = vbcast.lane.b32.xlu0 %v165, 256
    %v168 = vpop.permute.xlu0 %167
    %v169 = vlaneseq
    %v170 = vshrl.u32 %v169, 7
    %v171 = vsub.s32 3, %v170
    %v172 = vrot.slane %v88, %v171
    %174 = vbcast.lane.b32.xlu0 %v172, 256
    %v175 = vpop.permute.xlu0 %174
    %v176 = vlaneseq
    %v177 = vshrl.u32 %v176, 7
    %v178 = vsub.s32 4, %v177
    %v179 = vrot.slane %v88, %v178
    %181 = vbcast.lane.b32.xlu0 %v179, 256
    %v182 = vpop.permute.xlu0 %181
    %v183 = vlaneseq
    %v184 = vshrl.u32 %v183, 7
    %v185 = vsub.s32 5, %v184
    %v186 = vrot.slane %v88, %v185
    %188 = vbcast.lane.b32.xlu0 %v186, 256
    %v189 = vpop.permute.xlu0 %188
    %v190 = vlaneseq
    %v191 = vshrl.u32 %v190, 7
    %v192 = vsub.s32 6, %v191
    %v193 = vrot.slane %v88, %v192
    %195 = vbcast.lane.b32.xlu0 %v193, 256
    %v196 = vpop.permute.xlu0 %195
    %v197 = vlaneseq
    %v198 = vshrl.u32 %v197, 7
    %v199 = vsub.s32 7, %v198
    %v200 = vrot.slane %v88, %v199
    %202 = vbcast.lane.b32.xlu0 %v200, 256
    %v203 = vpop.permute.xlu0 %202
    %v204 = vmul.f32 %v76, %v98
    %v205 = vmul.f32 %v76, %v105
    %v206 = vmul.f32 %v76, %v112
    %v207 = vmul.f32 %v76, %v119
    %v208 = vmul.f32 %v76, %v126
    %v209 = vmul.f32 %v76, %v133
    %v210 = vmul.f32 %v76, %v140
    %v211 = vmul.f32 %v76, %v147
    %v212 = vmul.f32 %v80, %v154
    %v213 = vmul.f32 %v80, %v161
    %v214 = vmul.f32 %v80, %v168
    %v215 = vmul.f32 %v80, %v175
    %v216 = vmul.f32 %v80, %v182
    %v217 = vmul.f32 %v80, %v189
    %v218 = vmul.f32 %v80, %v196
    %v219 = vmul.f32 %v80, %v203
    %v220 = vsub.f32 %v204, %v212
    %v221 = vsub.f32 %v205, %v213
    %v222 = vsub.f32 %v206, %v214
    %v223 = vsub.f32 %v207, %v215
    %v224 = vsub.f32 %v208, %v216
    %v225 = vsub.f32 %v209, %v217
    %v226 = vsub.f32 %v210, %v218
    %v227 = vsub.f32 %v211, %v219
    %v228 = vmul.f32 %v76, %v154
    %v229 = vmul.f32 %v76, %v161
    %v230 = vmul.f32 %v76, %v168
    %v231 = vmul.f32 %v76, %v175
    %v232 = vmul.f32 %v76, %v182
    %v233 = vmul.f32 %v76, %v189
    %v234 = vmul.f32 %v76, %v196
    %v235 = vmul.f32 %v76, %v203
    %v236 = vmul.f32 %v80, %v98
    %v237 = vmul.f32 %v80, %v105
    %v238 = vmul.f32 %v80, %v112
    %v239 = vmul.f32 %v80, %v119
    %v240 = vmul.f32 %v80, %v126
    %v241 = vmul.f32 %v80, %v133
    %v242 = vmul.f32 %v80, %v140
    %v243 = vmul.f32 %v80, %v147
    %v244 = vadd.f32 %v228, %v236
    %v245 = vadd.f32 %v229, %v237
    %v246 = vadd.f32 %v230, %v238
    %v247 = vadd.f32 %v231, %v239
    %v248 = vadd.f32 %v232, %v240
    %v249 = vadd.f32 %v233, %v241
    %v250 = vadd.f32 %v234, %v242
    %v251 = vadd.f32 %v235, %v243
    %v252 = vlaneseq
    %v253 = vshrl.u32 %v252, 7
    %v254 = vsub.s32 0, %v253
    %v255 = vrot.slane %v85, %v254
    %257 = vbcast.lane.b32.xlu0 %v255, 256
    %v258 = vpop.permute.xlu0 %257
    %v259 = vlaneseq
    %v260 = vshrl.u32 %v259, 7
    %v261 = vsub.s32 1, %v260
    %v262 = vrot.slane %v85, %v261
    %264 = vbcast.lane.b32.xlu0 %v262, 256
    %v265 = vpop.permute.xlu0 %264
    %v266 = vlaneseq
    %v267 = vshrl.u32 %v266, 7
    %v268 = vsub.s32 2, %v267
    %v269 = vrot.slane %v85, %v268
    %271 = vbcast.lane.b32.xlu0 %v269, 256
    %v272 = vpop.permute.xlu0 %271
    %v273 = vlaneseq
    %v274 = vshrl.u32 %v273, 7
    %v275 = vsub.s32 3, %v274
    %v276 = vrot.slane %v85, %v275
    %278 = vbcast.lane.b32.xlu0 %v276, 256
    %v279 = vpop.permute.xlu0 %278
    %v280 = vlaneseq
    %v281 = vshrl.u32 %v280, 7
    %v282 = vsub.s32 4, %v281
    %v283 = vrot.slane %v85, %v282
    %285 = vbcast.lane.b32.xlu0 %v283, 256
    %v286 = vpop.permute.xlu0 %285
    %v287 = vlaneseq
    %v288 = vshrl.u32 %v287, 7
    %v289 = vsub.s32 5, %v288
    %v290 = vrot.slane %v85, %v289
    %292 = vbcast.lane.b32.xlu0 %v290, 256
    %v293 = vpop.permute.xlu0 %292
    %v294 = vlaneseq
    %v295 = vshrl.u32 %v294, 7
    %v296 = vsub.s32 6, %v295
    %v297 = vrot.slane %v85, %v296
    %299 = vbcast.lane.b32.xlu0 %v297, 256
    %v300 = vpop.permute.xlu0 %299
    %v301 = vlaneseq
    %v302 = vshrl.u32 %v301, 7
    %v303 = vsub.s32 7, %v302
    %v304 = vrot.slane %v85, %v303
    %306 = vbcast.lane.b32.xlu0 %v304, 256
    %v307 = vpop.permute.xlu0 %306
    %v308 = vlaneseq
    %v309 = vshrl.u32 %v308, 7
    %v310 = vsub.s32 0, %v309
    %v311 = vrot.slane %v89, %v310
    %313 = vbcast.lane.b32.xlu0 %v311, 256
    %v314 = vpop.permute.xlu0 %313
    %v315 = vlaneseq
    %v316 = vshrl.u32 %v315, 7
    %v317 = vsub.s32 1, %v316
    %v318 = vrot.slane %v89, %v317
    %320 = vbcast.lane.b32.xlu0 %v318, 256
    %v321 = vpop.permute.xlu0 %320
    %v322 = vlaneseq
    %v323 = vshrl.u32 %v322, 7
    %v324 = vsub.s32 2, %v323
    %v325 = vrot.slane %v89, %v324
    %327 = vbcast.lane.b32.xlu0 %v325, 256
    %v328 = vpop.permute.xlu0 %327
    %v329 = vlaneseq
    %v330 = vshrl.u32 %v329, 7
    %v331 = vsub.s32 3, %v330
    %v332 = vrot.slane %v89, %v331
    %334 = vbcast.lane.b32.xlu0 %v332, 256
    %v335 = vpop.permute.xlu0 %334
    %v336 = vlaneseq
    %v337 = vshrl.u32 %v336, 7
    %v338 = vsub.s32 4, %v337
    %v339 = vrot.slane %v89, %v338
    %341 = vbcast.lane.b32.xlu0 %v339, 256
    %v342 = vpop.permute.xlu0 %341
    %v343 = vlaneseq
    %v344 = vshrl.u32 %v343, 7
    %v345 = vsub.s32 5, %v344
    %v346 = vrot.slane %v89, %v345
    %348 = vbcast.lane.b32.xlu0 %v346, 256
    %v349 = vpop.permute.xlu0 %348
    %v350 = vlaneseq
    %v351 = vshrl.u32 %v350, 7
    %v352 = vsub.s32 6, %v351
    %v353 = vrot.slane %v89, %v352
    %355 = vbcast.lane.b32.xlu0 %v353, 256
    %v356 = vpop.permute.xlu0 %355
    %v357 = vlaneseq
    %v358 = vshrl.u32 %v357, 7
    %v359 = vsub.s32 7, %v358
    %v360 = vrot.slane %v89, %v359
    %362 = vbcast.lane.b32.xlu0 %v360, 256
    %v363 = vpop.permute.xlu0 %362
    %v364 = vmul.f32 %v77, %v258
    %v365 = vmul.f32 %v77, %v265
    %v366 = vmul.f32 %v77, %v272
    %v367 = vmul.f32 %v77, %v279
    %v368 = vmul.f32 %v77, %v286
    %v369 = vmul.f32 %v77, %v293
    %v370 = vmul.f32 %v77, %v300
    %v371 = vmul.f32 %v77, %v307
    %v372 = vmul.f32 %v81, %v314
    %v373 = vmul.f32 %v81, %v321
    %v374 = vmul.f32 %v81, %v328
    %v375 = vmul.f32 %v81, %v335
    %v376 = vmul.f32 %v81, %v342
    %v377 = vmul.f32 %v81, %v349
    %v378 = vmul.f32 %v81, %v356
    %v379 = vmul.f32 %v81, %v363
    %v380 = vsub.f32 %v364, %v372
    %v381 = vsub.f32 %v365, %v373
    %v382 = vsub.f32 %v366, %v374
    %v383 = vsub.f32 %v367, %v375
    %v384 = vsub.f32 %v368, %v376
    %v385 = vsub.f32 %v369, %v377
    %v386 = vsub.f32 %v370, %v378
    %v387 = vsub.f32 %v371, %v379
    %v388 = vmul.f32 %v77, %v314
    %v389 = vmul.f32 %v77, %v321
    %v390 = vmul.f32 %v77, %v328
    %v391 = vmul.f32 %v77, %v335
    %v392 = vmul.f32 %v77, %v342
    %v393 = vmul.f32 %v77, %v349
    %v394 = vmul.f32 %v77, %v356
    %v395 = vmul.f32 %v77, %v363
    %v396 = vmul.f32 %v81, %v258
    %v397 = vmul.f32 %v81, %v265
    %v398 = vmul.f32 %v81, %v272
    %v399 = vmul.f32 %v81, %v279
    %v400 = vmul.f32 %v81, %v286
    %v401 = vmul.f32 %v81, %v293
    %v402 = vmul.f32 %v81, %v300
    %v403 = vmul.f32 %v81, %v307
    %v404 = vadd.f32 %v388, %v396
    %v405 = vadd.f32 %v389, %v397
    %v406 = vadd.f32 %v390, %v398
    %v407 = vadd.f32 %v391, %v399
    %v408 = vadd.f32 %v392, %v400
    %v409 = vadd.f32 %v393, %v401
    %v410 = vadd.f32 %v394, %v402
    %v411 = vadd.f32 %v395, %v403
    %v412 = vadd.f32 %v220, %v380
    %v413 = vadd.f32 %v221, %v381
    %v414 = vadd.f32 %v222, %v382
    %v415 = vadd.f32 %v223, %v383
    %v416 = vadd.f32 %v224, %v384
    %v417 = vadd.f32 %v225, %v385
    %v418 = vadd.f32 %v226, %v386
    %v419 = vadd.f32 %v227, %v387
    %v420 = vadd.f32 %v244, %v404
    %v421 = vadd.f32 %v245, %v405
    %v422 = vadd.f32 %v246, %v406
    %v423 = vadd.f32 %v247, %v407
    %v424 = vadd.f32 %v248, %v408
    %v425 = vadd.f32 %v249, %v409
    %v426 = vadd.f32 %v250, %v410
    %v427 = vadd.f32 %v251, %v411
    %v428 = vlaneseq
    %v429 = vshrl.u32 %v428, 7
    %v430 = vsub.s32 0, %v429
    %v431 = vrot.slane %v86, %v430
    %433 = vbcast.lane.b32.xlu0 %v431, 256
    %v434 = vpop.permute.xlu0 %433
    %v435 = vlaneseq
    %v436 = vshrl.u32 %v435, 7
    %v437 = vsub.s32 1, %v436
    %v438 = vrot.slane %v86, %v437
    %440 = vbcast.lane.b32.xlu0 %v438, 256
    %v441 = vpop.permute.xlu0 %440
    %v442 = vlaneseq
    %v443 = vshrl.u32 %v442, 7
    %v444 = vsub.s32 2, %v443
    %v445 = vrot.slane %v86, %v444
    %447 = vbcast.lane.b32.xlu0 %v445, 256
    %v448 = vpop.permute.xlu0 %447
    %v449 = vlaneseq
    %v450 = vshrl.u32 %v449, 7
    %v451 = vsub.s32 3, %v450
    %v452 = vrot.slane %v86, %v451
    %454 = vbcast.lane.b32.xlu0 %v452, 256
    %v455 = vpop.permute.xlu0 %454
    %v456 = vlaneseq
    %v457 = vshrl.u32 %v456, 7
    %v458 = vsub.s32 4, %v457
    %v459 = vrot.slane %v86, %v458
    %461 = vbcast.lane.b32.xlu0 %v459, 256
    %v462 = vpop.permute.xlu0 %461
    %v463 = vlaneseq
    %v464 = vshrl.u32 %v463, 7
    %v465 = vsub.s32 5, %v464
    %v466 = vrot.slane %v86, %v465
    %468 = vbcast.lane.b32.xlu0 %v466, 256
    %v469 = vpop.permute.xlu0 %468
    %v470 = vlaneseq
    %v471 = vshrl.u32 %v470, 7
    %v472 = vsub.s32 6, %v471
    %v473 = vrot.slane %v86, %v472
    %475 = vbcast.lane.b32.xlu0 %v473, 256
    %v476 = vpop.permute.xlu0 %475
    %v477 = vlaneseq
    %v478 = vshrl.u32 %v477, 7
    %v479 = vsub.s32 7, %v478
    %v480 = vrot.slane %v86, %v479
    %482 = vbcast.lane.b32.xlu0 %v480, 256
    %v483 = vpop.permute.xlu0 %482
    %v484 = vlaneseq
    %v485 = vshrl.u32 %v484, 7
    %v486 = vsub.s32 0, %v485
    %v487 = vrot.slane %v90, %v486
    %489 = vbcast.lane.b32.xlu0 %v487, 256
    %v490 = vpop.permute.xlu0 %489
    %v491 = vlaneseq
    %v492 = vshrl.u32 %v491, 7
    %v493 = vsub.s32 1, %v492
    %v494 = vrot.slane %v90, %v493
    %496 = vbcast.lane.b32.xlu0 %v494, 256
    %v497 = vpop.permute.xlu0 %496
    %v498 = vlaneseq
    %v499 = vshrl.u32 %v498, 7
    %v500 = vsub.s32 2, %v499
    %v501 = vrot.slane %v90, %v500
    %503 = vbcast.lane.b32.xlu0 %v501, 256
    %v504 = vpop.permute.xlu0 %503
    %v505 = vlaneseq
    %v506 = vshrl.u32 %v505, 7
    %v507 = vsub.s32 3, %v506
    %v508 = vrot.slane %v90, %v507
    %510 = vbcast.lane.b32.xlu0 %v508, 256
    %v511 = vpop.permute.xlu0 %510
    %v512 = vlaneseq
    %v513 = vshrl.u32 %v512, 7
    %v514 = vsub.s32 4, %v513
    %v515 = vrot.slane %v90, %v514
    %517 = vbcast.lane.b32.xlu0 %v515, 256
    %v518 = vpop.permute.xlu0 %517
    %v519 = vlaneseq
    %v520 = vshrl.u32 %v519, 7
    %v521 = vsub.s32 5, %v520
    %v522 = vrot.slane %v90, %v521
    %524 = vbcast.lane.b32.xlu0 %v522, 256
    %v525 = vpop.permute.xlu0 %524
    %v526 = vlaneseq
    %v527 = vshrl.u32 %v526, 7
    %v528 = vsub.s32 6, %v527
    %v529 = vrot.slane %v90, %v528
    %531 = vbcast.lane.b32.xlu0 %v529, 256
    %v532 = vpop.permute.xlu0 %531
    %v533 = vlaneseq
    %v534 = vshrl.u32 %v533, 7
    %v535 = vsub.s32 7, %v534
    %v536 = vrot.slane %v90, %v535
    %538 = vbcast.lane.b32.xlu0 %v536, 256
    %v539 = vpop.permute.xlu0 %538
    %v540 = vmul.f32 %v78, %v434
    %v541 = vmul.f32 %v78, %v441
    %v542 = vmul.f32 %v78, %v448
    %v543 = vmul.f32 %v78, %v455
    %v544 = vmul.f32 %v78, %v462
    %v545 = vmul.f32 %v78, %v469
    %v546 = vmul.f32 %v78, %v476
    %v547 = vmul.f32 %v78, %v483
    %v548 = vmul.f32 %v82, %v490
    %v549 = vmul.f32 %v82, %v497
    %v550 = vmul.f32 %v82, %v504
    %v551 = vmul.f32 %v82, %v511
    %v552 = vmul.f32 %v82, %v518
    %v553 = vmul.f32 %v82, %v525
    %v554 = vmul.f32 %v82, %v532
    %v555 = vmul.f32 %v82, %v539
    %v556 = vsub.f32 %v540, %v548
    %v557 = vsub.f32 %v541, %v549
    %v558 = vsub.f32 %v542, %v550
    %v559 = vsub.f32 %v543, %v551
    %v560 = vsub.f32 %v544, %v552
    %v561 = vsub.f32 %v545, %v553
    %v562 = vsub.f32 %v546, %v554
    %v563 = vsub.f32 %v547, %v555
    %v564 = vmul.f32 %v78, %v490
    %v565 = vmul.f32 %v78, %v497
    %v566 = vmul.f32 %v78, %v504
    %v567 = vmul.f32 %v78, %v511
    %v568 = vmul.f32 %v78, %v518
    %v569 = vmul.f32 %v78, %v525
    %v570 = vmul.f32 %v78, %v532
    %v571 = vmul.f32 %v78, %v539
    %v572 = vmul.f32 %v82, %v434
    %v573 = vmul.f32 %v82, %v441
    %v574 = vmul.f32 %v82, %v448
    %v575 = vmul.f32 %v82, %v455
    %v576 = vmul.f32 %v82, %v462
    %v577 = vmul.f32 %v82, %v469
    %v578 = vmul.f32 %v82, %v476
    %v579 = vmul.f32 %v82, %v483
    %v580 = vadd.f32 %v564, %v572
    %v581 = vadd.f32 %v565, %v573
    %v582 = vadd.f32 %v566, %v574
    %v583 = vadd.f32 %v567, %v575
    %v584 = vadd.f32 %v568, %v576
    %v585 = vadd.f32 %v569, %v577
    %v586 = vadd.f32 %v570, %v578
    %v587 = vadd.f32 %v571, %v579
    %v588 = vadd.f32 %v412, %v556
    %v589 = vadd.f32 %v413, %v557
    %v590 = vadd.f32 %v414, %v558
    %v591 = vadd.f32 %v415, %v559
    %v592 = vadd.f32 %v416, %v560
    %v593 = vadd.f32 %v417, %v561
    %v594 = vadd.f32 %v418, %v562
    %v595 = vadd.f32 %v419, %v563
    %v596 = vadd.f32 %v420, %v580
    %v597 = vadd.f32 %v421, %v581
    %v598 = vadd.f32 %v422, %v582
    %v599 = vadd.f32 %v423, %v583
    %v600 = vadd.f32 %v424, %v584
    %v601 = vadd.f32 %v425, %v585
    %v602 = vadd.f32 %v426, %v586
    %v603 = vadd.f32 %v427, %v587
    %v604 = vlaneseq
    %v605 = vshrl.u32 %v604, 7
    %v606 = vsub.s32 0, %v605
    %v607 = vrot.slane %v87, %v606
    %609 = vbcast.lane.b32.xlu0 %v607, 256
    %v610 = vpop.permute.xlu0 %609
    %v611 = vlaneseq
    %v612 = vshrl.u32 %v611, 7
    %v613 = vsub.s32 1, %v612
    %v614 = vrot.slane %v87, %v613
    %616 = vbcast.lane.b32.xlu0 %v614, 256
    %v617 = vpop.permute.xlu0 %616
    %v618 = vlaneseq
    %v619 = vshrl.u32 %v618, 7
    %v620 = vsub.s32 2, %v619
    %v621 = vrot.slane %v87, %v620
    %623 = vbcast.lane.b32.xlu0 %v621, 256
    %v624 = vpop.permute.xlu0 %623
    %v625 = vlaneseq
    %v626 = vshrl.u32 %v625, 7
    %v627 = vsub.s32 3, %v626
    %v628 = vrot.slane %v87, %v627
    %630 = vbcast.lane.b32.xlu0 %v628, 256
    %v631 = vpop.permute.xlu0 %630
    %v632 = vlaneseq
    %v633 = vshrl.u32 %v632, 7
    %v634 = vsub.s32 4, %v633
    %v635 = vrot.slane %v87, %v634
    %637 = vbcast.lane.b32.xlu0 %v635, 256
    %v638 = vpop.permute.xlu0 %637
    %v639 = vlaneseq
    %v640 = vshrl.u32 %v639, 7
    %v641 = vsub.s32 5, %v640
    %v642 = vrot.slane %v87, %v641
    %644 = vbcast.lane.b32.xlu0 %v642, 256
    %v645 = vpop.permute.xlu0 %644
    %v646 = vlaneseq
    %v647 = vshrl.u32 %v646, 7
    %v648 = vsub.s32 6, %v647
    %v649 = vrot.slane %v87, %v648
    %651 = vbcast.lane.b32.xlu0 %v649, 256
    %v652 = vpop.permute.xlu0 %651
    %v653 = vlaneseq
    %v654 = vshrl.u32 %v653, 7
    %v655 = vsub.s32 7, %v654
    %v656 = vrot.slane %v87, %v655
    %658 = vbcast.lane.b32.xlu0 %v656, 256
    %v659 = vpop.permute.xlu0 %658
    %v660 = vlaneseq
    %v661 = vshrl.u32 %v660, 7
    %v662 = vsub.s32 0, %v661
    %v663 = vrot.slane %v91, %v662
    %665 = vbcast.lane.b32.xlu0 %v663, 256
    %v666 = vpop.permute.xlu0 %665
    %v667 = vlaneseq
    %v668 = vshrl.u32 %v667, 7
    %v669 = vsub.s32 1, %v668
    %v670 = vrot.slane %v91, %v669
    %672 = vbcast.lane.b32.xlu0 %v670, 256
    %v673 = vpop.permute.xlu0 %672
    %v674 = vlaneseq
    %v675 = vshrl.u32 %v674, 7
    %v676 = vsub.s32 2, %v675
    %v677 = vrot.slane %v91, %v676
    %679 = vbcast.lane.b32.xlu0 %v677, 256
    %v680 = vpop.permute.xlu0 %679
    %v681 = vlaneseq
    %v682 = vshrl.u32 %v681, 7
    %v683 = vsub.s32 3, %v682
    %v684 = vrot.slane %v91, %v683
    %686 = vbcast.lane.b32.xlu0 %v684, 256
    %v687 = vpop.permute.xlu0 %686
    %v688 = vlaneseq
    %v689 = vshrl.u32 %v688, 7
    %v690 = vsub.s32 4, %v689
    %v691 = vrot.slane %v91, %v690
    %693 = vbcast.lane.b32.xlu0 %v691, 256
    %v694 = vpop.permute.xlu0 %693
    %v695 = vlaneseq
    %v696 = vshrl.u32 %v695, 7
    %v697 = vsub.s32 5, %v696
    %v698 = vrot.slane %v91, %v697
    %700 = vbcast.lane.b32.xlu0 %v698, 256
    %v701 = vpop.permute.xlu0 %700
    %v702 = vlaneseq
    %v703 = vshrl.u32 %v702, 7
    %v704 = vsub.s32 6, %v703
    %v705 = vrot.slane %v91, %v704
    %707 = vbcast.lane.b32.xlu0 %v705, 256
    %v708 = vpop.permute.xlu0 %707
    %v709 = vlaneseq
    %v710 = vshrl.u32 %v709, 7
    %v711 = vsub.s32 7, %v710
    %v712 = vrot.slane %v91, %v711
    %714 = vbcast.lane.b32.xlu0 %v712, 256
    %v715 = vpop.permute.xlu0 %714
    %v716 = vmul.f32 %v79, %v610
    %v717 = vmul.f32 %v79, %v617
    %v718 = vmul.f32 %v79, %v624
    %v719 = vmul.f32 %v79, %v631
    %v720 = vmul.f32 %v79, %v638
    %v721 = vmul.f32 %v79, %v645
    %v722 = vmul.f32 %v79, %v652
    %v723 = vmul.f32 %v79, %v659
    %v724 = vmul.f32 %v83, %v666
    %v725 = vmul.f32 %v83, %v673
    %v726 = vmul.f32 %v83, %v680
    %v727 = vmul.f32 %v83, %v687
    %v728 = vmul.f32 %v83, %v694
    %v729 = vmul.f32 %v83, %v701
    %v730 = vmul.f32 %v83, %v708
    %v731 = vmul.f32 %v83, %v715
    %v732 = vsub.f32 %v716, %v724
    %v733 = vsub.f32 %v717, %v725
    %v734 = vsub.f32 %v718, %v726
    %v735 = vsub.f32 %v719, %v727
    %v736 = vsub.f32 %v720, %v728
    %v737 = vsub.f32 %v721, %v729
    %v738 = vsub.f32 %v722, %v730
    %v739 = vsub.f32 %v723, %v731
    %v740 = vmul.f32 %v79, %v666
    %v741 = vmul.f32 %v79, %v673
    %v742 = vmul.f32 %v79, %v680
    %v743 = vmul.f32 %v79, %v687
    %v744 = vmul.f32 %v79, %v694
    %v745 = vmul.f32 %v79, %v701
    %v746 = vmul.f32 %v79, %v708
    %v747 = vmul.f32 %v79, %v715
    %v748 = vmul.f32 %v83, %v610
    %v749 = vmul.f32 %v83, %v617
    %v750 = vmul.f32 %v83, %v624
    %v751 = vmul.f32 %v83, %v631
    %v752 = vmul.f32 %v83, %v638
    %v753 = vmul.f32 %v83, %v645
    %v754 = vmul.f32 %v83, %v652
    %v755 = vmul.f32 %v83, %v659
    %v756 = vadd.f32 %v740, %v748
    %v757 = vadd.f32 %v741, %v749
    %v758 = vadd.f32 %v742, %v750
    %v759 = vadd.f32 %v743, %v751
    %v760 = vadd.f32 %v744, %v752
    %v761 = vadd.f32 %v745, %v753
    %v762 = vadd.f32 %v746, %v754
    %v763 = vadd.f32 %v747, %v755
    %v764 = vadd.f32 %v588, %v732
    %v765 = vadd.f32 %v589, %v733
    %v766 = vadd.f32 %v590, %v734
    %v767 = vadd.f32 %v591, %v735
    %v768 = vadd.f32 %v592, %v736
    %v769 = vadd.f32 %v593, %v737
    %v770 = vadd.f32 %v594, %v738
    %v771 = vadd.f32 %v595, %v739
    %v772 = vadd.f32 %v596, %v756
    %v773 = vadd.f32 %v597, %v757
    %v774 = vadd.f32 %v598, %v758
    %v775 = vadd.f32 %v599, %v759
    %v776 = vadd.f32 %v600, %v760
    %v777 = vadd.f32 %v601, %v761
    %v778 = vadd.f32 %v602, %v762
    %v779 = vadd.f32 %v603, %v763
    %780 = vst [vmem:[#allocation10] sm:$0xff] %v764
    %781 = vst [vmem:[#allocation10 + $0x8] sm:$0xff] %v765
    %782 = vst [vmem:[#allocation10 + $0x10] sm:$0xff] %v766
    %783 = vst [vmem:[#allocation10 + $0x18] sm:$0xff] %v767
    %784 = vst [vmem:[#allocation10 + $0x20] sm:$0xff] %v768
    %785 = vst [vmem:[#allocation10 + $0x28] sm:$0xff] %v769
    %786 = vst [vmem:[#allocation10 + $0x30] sm:$0xff] %v770
    %787 = vst [vmem:[#allocation10 + $0x38] sm:$0xff] %v771
    %788 = vst [vmem:[#allocation11] sm:$0xff] %v772
    %789 = vst [vmem:[#allocation11 + $0x8] sm:$0xff] %v773
    %790 = vst [vmem:[#allocation11 + $0x10] sm:$0xff] %v774
    %791 = vst [vmem:[#allocation11 + $0x18] sm:$0xff] %v775
    %792 = vst [vmem:[#allocation11 + $0x20] sm:$0xff] %v776
    %793 = vst [vmem:[#allocation11 + $0x28] sm:$0xff] %v777
    %794 = vst [vmem:[#allocation11 + $0x30] sm:$0xff] %v778
    %795 = vst [vmem:[#allocation11 + $0x38] sm:$0xff] %v779
    // Predicated region
    $region34: #{tpu_custom_call.1} parent=1 // pred_check
      _
    $region35: #{tpu_custom_call.1} parent=1 // pred_check_branch
      %797 = sbr.rel (0) target = $region37
    $region36: #{tpu_custom_call.1} parent=1 // pred_region
      %s799 = ssub.s32 1024, 1024
      %800 = vsyncadd [#allocation4], %s799
      %s801 = sshll.u32 [#allocation10], 4
      %s802 = int_to_ptr.vmem [resolvable:$true] %s801
      %807 = dma.vmem_to_hbm [thread:$0]  %s802, 1024, %s4, [#allocation4], 128, 128, 8
    $region37: #{tpu_custom_call.1} parent=1 // pred_fallthru
      _
    // Predicated region
    $region38: #{tpu_custom_call.1} parent=1 // pred_check
      _
    $region39: #{tpu_custom_call.1} parent=1 // pred_check_branch
      %809 = sbr.rel (0) target = $region41
    $region40: #{tpu_custom_call.1} parent=1 // pred_region
      %s811 = ssub.s32 1024, 1024
      %812 = vsyncadd [#allocation12], %s811
      %s813 = sshll.u32 [#allocation11], 4
      %s814 = int_to_ptr.vmem [resolvable:$true] %s813
      %819 = dma.vmem_to_hbm [thread:$0]  %s814, 1024, %s5, [#allocation12], 128, 128, 8
    $region41: #{tpu_custom_call.1} parent=1 // pred_fallthru
      _
    // Predicated region
    $region42: #{tpu_custom_call.1} parent=1 // pred_check
      _
    $region43: #{tpu_custom_call.1} parent=1 // pred_check_branch
      %821 = sbr.rel (0) target = $region45
    $region44: #{tpu_custom_call.1} parent=1 // pred_region
      %822 = dma.done [#allocation4], 1024
    $region45: #{tpu_custom_call.1} parent=1 // pred_fallthru
      _
    // Predicated region
    $region46: #{tpu_custom_call.1} parent=1 // pred_check
      _
    $region47: #{tpu_custom_call.1} parent=1 // pred_check_branch
      %824 = sbr.rel (0) target = $region49
    $region48: #{tpu_custom_call.1} parent=1 // pred_region
      %825 = dma.done [#allocation12], 1024
    $region49: #{tpu_custom_call.1} parent=1 // pred_fallthru
      _
    %826 = vsyncpa [#allocation3], 1
    %827 = vsyncpa [#allocation6], 1
    %828 = vsyncpa [#allocation9], 1
    %829 = vsyncpa [#allocation4], 1
    %830 = vsyncpa [#allocation12], 1

</llo_original>
